<compile_context>
chip_gen: v6e
topology: v6e:2x2x1
jax: 0.10.0
libtpu: 0.0.40
codegen_flags: <defaults>
</compile_context>

<pallas_src>
import math
from collections import OrderedDict

import jax
import jax.numpy as jnp
from jax.experimental import pallas as pl
from jax.experimental.pallas import tpu as pltpu


IN_FEATURES = 160
HIDDEN = 32
OUT_FEATURES = 10
FC2_PAD = 16          # fc2 output padded to 16 lanes (64 B/row, aligned rows)


# -----------------------------------------------------------------------------
# Kernels: fc1 -> ReLU -> fc2, one batch tile per grid step.
# -----------------------------------------------------------------------------
def _fc2_kernel(x_ref, w1_ref, b1_ref, w2p_ref, b2p_ref, y_ref):
    h = jnp.dot(x_ref[...], w1_ref[...], preferred_element_type=jnp.float32)
    h = jnp.maximum(h + b1_ref[...], 0.0)                           # (tb, 32) f32
    y_ref[...] = (jnp.dot(h, w2p_ref[...], preferred_element_type=jnp.float32)
                  + b2p_ref[...])                                   # (tb, 16) f32


def _fc1_fc2_kernel(x_ref, w1_ref, b1_ref, w2p_ref, b2p_ref, h_ref, y_ref):
    # Same, but also emits the exact ReLU activations (fc1 output) directly.
    h = jnp.dot(x_ref[...], w1_ref[...], preferred_element_type=jnp.float32)
    h = jnp.maximum(h + b1_ref[...], 0.0)
    h_ref[...] = h                                                  # (tb, 32) f32
    y_ref[...] = (jnp.dot(h, w2p_ref[...], preferred_element_type=jnp.float32)
                  + b2p_ref[...])                                   # (tb, 16) f32


# -----------------------------------------------------------------------------
# Tile sizing / VMEM accounting.
# -----------------------------------------------------------------------------
_VMEM_BUDGET = 40 * 1024 * 1024   # stay well under v7x's 64 MiB physical VMEM


def _lane_pad(n):
    return ((n + 127) // 128) * 128


def _tile_bytes(tb, x_itemsize, out_widths):
    # Double-buffered x tile + double-buffered output tile(s), lane-padded.
    b = 2 * tb * _lane_pad(IN_FEATURES) * x_itemsize
    for w in out_widths:
        b += 2 * tb * _lane_pad(w) * 4
    return b


def _choose_tile(batch, block_rows, x_itemsize, out_widths):
    # Target >= ~8 grid steps (v7x: 2 TCs x >=4 steps each for DMA/compute
    # overlap), floor at 256 rows, cap by the VMEM budget, sublane-align.
    tb = max(256, -(-batch // 8))
    tb = min(tb, block_rows)
    while tb > 512 and _tile_bytes(tb, x_itemsize, out_widths) > _VMEM_BUDGET:
        tb //= 2
    tb = ((tb + 7) // 8) * 8
    tb = min(tb, ((batch + 7) // 8) * 8)          # never bigger than (rounded) B
    return max(8, tb)


# -----------------------------------------------------------------------------
# Pallas entry point.
# -----------------------------------------------------------------------------
def infernet_pallas(x_flat, w1, b1, w2p, b2p, *, include_fc1, block_rows=4096):
    """Fused fc1 -> ReLU -> fc2 over a batch-tiled grid (no pad, no un-pad).

    x_flat: (B, 160)  f32 or bf16
    w1:     (160, 32) same dtype as x_flat (fc1.weight.T)
    b1:     (1, 32)   f32
    w2p:    (32, 16)  f32 (fc2.weight.T in cols 0..9)
    b2p:    (1, 16)   f32
    Returns y (B, 16) f32; with include_fc1, (h (B, 32) f32, y (B, 16) f32).
    """
    B, F = x_flat.shape
    assert F == IN_FEATURES
    out_widths = (HIDDEN, FC2_PAD) if include_fc1 else (FC2_PAD,)
    x_itemsize = jnp.dtype(x_flat.dtype).itemsize
    tb = _choose_tile(B, block_rows, x_itemsize, out_widths)
    n_blocks = pl.cdiv(B, tb)     # partial final block handled by Pallas masking
    vmem_limit = _tile_bytes(tb, x_itemsize, out_widths) + (4 << 20)
    vmem_limit = int(min(max(vmem_limit, 8 << 20), 56 << 20))

    in_specs = [
        pl.BlockSpec((tb, F), lambda i: (i, 0)),            # x: streamed per tile
        pl.BlockSpec((F, HIDDEN), lambda i: (0, 0)),         # w1: resident
        pl.BlockSpec((1, HIDDEN), lambda i: (0, 0)),         # b1: resident
        pl.BlockSpec((HIDDEN, FC2_PAD), lambda i: (0, 0)),   # packed w2: resident
        pl.BlockSpec((1, FC2_PAD), lambda i: (0, 0)),        # packed b2: resident
    ]
    cp = pltpu.CompilerParams(dimension_semantics=("parallel",),
                              vmem_limit_bytes=vmem_limit)

    if include_fc1:
        h, y = pl.pallas_call(
            _fc1_fc2_kernel,
            out_shape=(jax.ShapeDtypeStruct((B, HIDDEN), jnp.float32),
                       jax.ShapeDtypeStruct((B, FC2_PAD), jnp.float32)),
            grid=(n_blocks,),
            in_specs=in_specs,
            out_specs=(pl.BlockSpec((tb, HIDDEN), lambda i: (i, 0)),
                       pl.BlockSpec((tb, FC2_PAD), lambda i: (i, 0))),
            compiler_params=cp,
        )(x_flat, w1, b1, w2p, b2p)
        return h, y

    y = pl.pallas_call(
        _fc2_kernel,
        out_shape=jax.ShapeDtypeStruct((B, FC2_PAD), jnp.float32),
        grid=(n_blocks,),
        in_specs=in_specs,
        out_specs=pl.BlockSpec((tb, FC2_PAD), lambda i: (i, 0)),
        compiler_params=cp,
    )(x_flat, w1, b1, w2p, b2p)
    return y


# -----------------------------------------------------------------------------
# Weight packing (trace-time, tiny; constant-folds under jit).
# -----------------------------------------------------------------------------
def _pack_weights(w1, b1, w2, b2, x_dtype):
    w1c = w1.astype(x_dtype)
    b1c = b1.reshape(1, HIDDEN).astype(jnp.float32)
    w2p = jnp.zeros((HIDDEN, FC2_PAD), jnp.float32).at[:, :OUT_FEATURES].set(
        w2.astype(jnp.float32))
    b2p = jnp.zeros((1, FC2_PAD), jnp.float32).at[:, :OUT_FEATURES].set(
        b2.reshape(1, OUT_FEATURES).astype(jnp.float32))
    return w1c, b1c, w2p, b2p


# -----------------------------------------------------------------------------
# Parameter construction (deterministic, PyTorch nn.Linear-style init).
# -----------------------------------------------------------------------------
def init_params(key):
    k1, k2, k3, k4 = jax.random.split(key, 4)
    bound1 = 1.0 / math.sqrt(160.0)
    bound2 = 1.0 / math.sqrt(32.0)
    w1 = jax.random.uniform(k1, (IN_FEATURES, HIDDEN), jnp.float32, -bound1, bound1)
    b1 = jax.random.uniform(k2, (1, HIDDEN), jnp.float32, -bound1, bound1)
    w2 = jax.random.uniform(k3, (HIDDEN, OUT_FEATURES), jnp.float32, -bound2, bound2)
    b2 = jax.random.uniform(k4, (1, OUT_FEATURES), jnp.float32, -bound2, bound2)
    return w1, b1, w2, b2


# -----------------------------------------------------------------------------
# Python wrapper reproducing InferNet.forward control flow.
# Call under jax.jit so the small (B,16)->(B,10) epilogue slice fuses with the
# consumer instead of being a standalone pass.
# -----------------------------------------------------------------------------
def infernet_forward(params, x, output_layers=('default',), meta_train=True,
                     noise_key=None, use_pallas=None, block_rows=4096):
    """x is any array with a leading batch dim and 160 trailing elements
    (mirrors x.view(x.size(0), -1) followed by fc1(160, 32))."""
    w1, b1, w2, b2 = params
    B = x.shape[0]
    x_flat = x.reshape(B, -1)
    # No wrapper-side bf16 cast: stream whatever dtype the caller provides.
    if x_flat.dtype not in (jnp.float32, jnp.bfloat16):
        x_flat = x_flat.astype(jnp.float32)
    output_layers = list(output_layers)
    need_fc1 = 'fc1' in output_layers

    # Fixed pallas_call / per-step overhead dwarfs the work at tiny batches.
    if use_pallas is None:
        use_pallas = B >= 512

    if use_pallas:
        w1c, b1c, w2p, b2p = _pack_weights(w1, b1, w2, b2, x_flat.dtype)
        if need_fc1:
            h1, y = infernet_pallas(x_flat, w1c, b1c, w2p, b2p,
                                    include_fc1=True, block_rows=block_rows)
        else:
            h1 = None
            y = infernet_pallas(x_flat, w1c, b1c, w2p, b2p,
                                include_fc1=False, block_rows=block_rows)
        out = y[:, :OUT_FEATURES]        # single small slice; fuses under jit
    else:
        xf = x_flat.astype(jnp.float32)
        h1 = jnp.maximum(xf @ w1.astype(jnp.float32) + b1.reshape(1, HIDDEN), 0.0)
        out = h1 @ w2.astype(jnp.float32) + b2.reshape(1, OUT_FEATURES)

    outputs = OrderedDict()
    if noise_key is None:
        noise_key = jax.random.PRNGKey(1)
    k_fc1, k_fc2 = jax.random.split(noise_key)

    # TODO(synk): if the meta_train outputs become the hot path, fuse the
    # randn + softplus epilogue into the kernel via pltpu.prng_seed /
    # pltpu.stateful_normal so the fc1/fc2 tensors are not re-read from HBM.
    def _meta_out(key, val):
        if meta_train:
            noise = jax.random.normal(key, val.shape, val.dtype)
            return jax.nn.softplus(noise + val)
        return val

    if 'fc1' in output_layers:
        outputs['fc1'] = _meta_out(k_fc1, h1)
        if len(output_layers) == len(outputs):
            return outputs
    if 'fc2' in output_layers:
        outputs['fc2'] = _meta_out(k_fc2, out)
        if len(output_layers) == len(outputs):
            return outputs
    if len(output_layers) == 1 and output_layers[0] == 'default':
        return out
    raise ValueError('output_layer is wrong.')


if __name__ == "__main__":
    key = jax.random.PRNGKey(0)
    pkey, xkey = jax.random.split(key)
    params = init_params(pkey)
    w1, b1, w2, b2 = params

    # fc1 expects 160 input features: x of shape (2, 10, 4, 4) -> (2, 160).
    x = jax.random.normal(xkey, (2, 10, 4, 4), jnp.float32)
    h_ref = jnp.maximum(x.reshape(2, -1) @ w1 + b1, 0.0)
    ref = h_ref @ w2 + b2

    # default path through the Pallas kernel (forced; batch is tiny).
    y = infernet_forward(params, x, use_pallas=True)
    y = jax.block_until_ready(y)
    assert y.shape == (2, 10)
    assert jnp.allclose(y, ref, atol=1e-5, rtol=1e-5)

    # 'fc1'/'fc2' meta_val branch (deterministic) via the two-output kernel;
    # fc1 activations are stored directly (no MXU identity pass).
    outs = infernet_forward(params, x, output_layers=['fc1', 'fc2'],
                            meta_train=False, use_pallas=True)
    jax.block_until_ready(outs['fc2'])
    assert outs['fc1'].shape == (2, 32) and outs['fc2'].shape == (2, 10)
    assert jnp.allclose(outs['fc1'], h_ref, atol=1e-5, rtol=1e-5)
    assert jnp.allclose(outs['fc2'], ref, atol=1e-5, rtol=1e-5)

    # meta_train=True branch (randn + softplus glue); check shapes only.
    outs_mt = infernet_forward(params, x, output_layers=['fc1', 'fc2'],
                               meta_train=True, use_pallas=True)
    jax.block_until_ready(outs_mt['fc2'])
    assert outs_mt['fc1'].shape == (2, 32) and outs_mt['fc2'].shape == (2, 10)

    # small-batch auto path falls back to plain XLA and agrees.
    y_auto = jax.block_until_ready(infernet_forward(params, x))
    assert jnp.allclose(y_auto, ref, atol=1e-5, rtol=1e-5)

    # a batch that actually tiles: multiple grid steps, B not a tile multiple,
    # exercising the no-pad / partial-final-block masked-writeback path.
    xb = jax.random.normal(jax.random.PRNGKey(2), (1037, 160), jnp.float32)
    ref_b = jnp.maximum(xb @ w1 + b1, 0.0) @ w2 + b2
    yb = infernet_forward(params, xb, use_pallas=True, block_rows=256)
    yb = jax.block_until_ready(yb)
    assert yb.shape == (1037, 10)
    assert jnp.allclose(yb, ref_b, atol=1e-4, rtol=1e-4)

    # same path under jit (recommended usage: the (B,16)->(B,10) slice fuses).
    yb_jit = jax.jit(lambda a: infernet_forward(params, a, use_pallas=True,
                                                block_rows=256))(xb)
    yb_jit = jax.block_until_ready(yb_jit)
    assert yb_jit.shape == (1037, 10)
    assert jnp.allclose(yb_jit, ref_b, atol=1e-4, rtol=1e-4)

    # caller-supplied bf16 x (no wrapper-side cast), checked vs rounded ref.
    yb16 = infernet_forward(params, xb.astype(jnp.bfloat16), use_pallas=True,
                            block_rows=256)
    yb16 = jax.block_until_ready(yb16)
    xb_r = xb.astype(jnp.bfloat16).astype(jnp.float32)
    w1_r = w1.astype(jnp.bfloat16).astype(jnp.float32)
    ref_b16 = jnp.maximum(xb_r @ w1_r + b1, 0.0) @ w2 + b2
    assert jnp.allclose(yb16, ref_b16, atol=1e-2, rtol=1e-2)

    print("KERNEL_OK")
</pallas_src>

<mosaic_0001>
module attributes {stable_mosaic.version = 11 : i64} {
  func.func @_fc2_kernel(%arg0: i32, %arg1: memref<8x160xf32, #tpu.memory_space<vmem>>, %arg2: memref<160x32xf32, #tpu.memory_space<vmem>>, %arg3: memref<1x32xf32, #tpu.memory_space<vmem>>, %arg4: memref<32x16xf32, #tpu.memory_space<vmem>>, %arg5: memref<1x16xf32, #tpu.memory_space<vmem>>, %arg6: memref<8x16xf32, #tpu.memory_space<vmem>>) attributes {dimension_semantics = [#tpu.dimension_semantics<parallel>], iteration_bounds = array<i64: 1>, scalar_prefetch = 0 : i64, scratch_operands = 0 : i64, tpu.core_type = #tpu.core_type<tc>, window_params = [{transform_indices = @transform_0, window_bounds = array<i64: 8, 160>}, {pipeline_mode = #tpu.pipeline_mode<synchronous>, transform_indices = @transform_1, window_bounds = array<i64: 160, 32>}, {pipeline_mode = #tpu.pipeline_mode<synchronous>, transform_indices = @transform_2, window_bounds = array<i64: 1, 32>}, {pipeline_mode = #tpu.pipeline_mode<synchronous>, transform_indices = @transform_3, window_bounds = array<i64: 32, 16>}, {pipeline_mode = #tpu.pipeline_mode<synchronous>, transform_indices = @transform_4, window_bounds = array<i64: 1, 16>}, {transform_indices = @transform_5, window_bounds = array<i64: 8, 16>}]} {
    %c0 = arith.constant 0 : index
    %c0_0 = arith.constant 0 : index
    %0 = vector.load %arg1[%c0, %c0_0] : memref<8x160xf32, #tpu.memory_space<vmem>>, vector<8x160xf32>
    %c0_1 = arith.constant 0 : index
    %c0_2 = arith.constant 0 : index
    %1 = vector.load %arg2[%c0_1, %c0_2] : memref<160x32xf32, #tpu.memory_space<vmem>>, vector<160x32xf32>
    %cst = arith.constant dense<0.000000e+00> : vector<8x32xf32>
    %2 = tpu.matmul %0, %1, %cst {dimension_numbers = #tpu.dot_dimension_numbers<[1], [0], [0], [1], [0, 0, 1, 1], [], []>} : vector<8x160xf32>, vector<160x32xf32>, vector<8x32xf32> -> vector<8x32xf32>
    %c0_3 = arith.constant 0 : index
    %c0_4 = arith.constant 0 : index
    %3 = vector.load %arg3[%c0_3, %c0_4] : memref<1x32xf32, #tpu.memory_space<vmem>>, vector<1x32xf32>
    %4 = vector.broadcast %3 : vector<1x32xf32> to vector<8x32xf32>
    %5 = arith.addf %2, %4 : vector<8x32xf32>
    %cst_5 = arith.constant 0.000000e+00 : f32
    %6 = vector.broadcast %cst_5 : f32 to vector<8x32xf32>
    %7 = arith.maximumf %5, %6 : vector<8x32xf32>
    %c0_6 = arith.constant 0 : index
    %c0_7 = arith.constant 0 : index
    %8 = vector.load %arg4[%c0_6, %c0_7] : memref<32x16xf32, #tpu.memory_space<vmem>>, vector<32x16xf32>
    %cst_8 = arith.constant dense<0.000000e+00> : vector<8x16xf32>
    %9 = tpu.matmul %7, %8, %cst_8 {dimension_numbers = #tpu.dot_dimension_numbers<[1], [0], [0], [1], [0, 0, 1, 1], [], []>} : vector<8x32xf32>, vector<32x16xf32>, vector<8x16xf32> -> vector<8x16xf32>
    %c0_9 = arith.constant 0 : index
    %c0_10 = arith.constant 0 : index
    %10 = vector.load %arg5[%c0_9, %c0_10] : memref<1x16xf32, #tpu.memory_space<vmem>>, vector<1x16xf32>
    %11 = vector.broadcast %10 : vector<1x16xf32> to vector<8x16xf32>
    %12 = arith.addf %9, %11 : vector<8x16xf32>
    %c0_11 = arith.constant 0 : index
    %c0_12 = arith.constant 0 : index
    %13 = vector.load %arg6[%c0_11, %c0_12] : memref<8x16xf32, #tpu.memory_space<vmem>>, vector<8x16xf32>
    tpu.vector_store %arg6[%c0_11, %c0_12], %12 {strides = array<i32>} : memref<8x16xf32, #tpu.memory_space<vmem>>, vector<8x16xf32>,
    return
  }
  func.func @transform_0(%arg0: i32) -> (i32, i32) {
    %c0_i32 = arith.constant 0 : i32
    %c0_i32_0 = arith.constant 0 : i32
    return %arg0, %c0_i32 : i32, i32
  }
  func.func @transform_1(%arg0: i32) -> (i32, i32) {
    %c0_i32 = arith.constant 0 : i32
    %c0_i32_0 = arith.constant 0 : i32
    %c0_i32_1 = arith.constant 0 : i32
    return %c0_i32, %c0_i32_0 : i32, i32
  }
  func.func @transform_2(%arg0: i32) -> (i32, i32) {
    %c0_i32 = arith.constant 0 : i32
    %c0_i32_0 = arith.constant 0 : i32
    %c0_i32_1 = arith.constant 0 : i32
    return %c0_i32, %c0_i32_0 : i32, i32
  }
  func.func @transform_3(%arg0: i32) -> (i32, i32) {
    %c0_i32 = arith.constant 0 : i32
    %c0_i32_0 = arith.constant 0 : i32
    %c0_i32_1 = arith.constant 0 : i32
    return %c0_i32, %c0_i32_0 : i32, i32
  }
  func.func @transform_4(%arg0: i32) -> (i32, i32) {
    %c0_i32 = arith.constant 0 : i32
    %c0_i32_0 = arith.constant 0 : i32
    %c0_i32_1 = arith.constant 0 : i32
    return %c0_i32, %c0_i32_0 : i32, i32
  }
  func.func @transform_5(%arg0: i32) -> (i32, i32) {
    %c0_i32 = arith.constant 0 : i32
    %c0_i32_0 = arith.constant 0 : i32
    return %arg0, %c0_i32 : i32, i32
  }
}

</mosaic_0001>

<llo_original>
// kernel: tpu_custom_call.1
$region0: #{tpu_custom_call.1}
  #allocation0 [shape = 'u32[]', space=smem, size = 0x4, offset = 0x4, fixed_abs, tag = 'smem constant byte address 0x4 - core index']
  #allocation1 [shape = 'u32[144,128]{1,0:T(1,128)}', space=vmem, size = 0x12000, scoped, tag = 'internal scratch']
  %s0 = inlined_call_operand.vmem [shape: f32[2,160], index: 0, kind: input, shape index: {}]
  %s1 = inlined_call_operand.vmem [shape: f32[160,32], index: 1, kind: input, shape index: {}]
  %s2 = inlined_call_operand.vmem [shape: f32[1,32], index: 2, kind: input, shape index: {}]
  %s3 = inlined_call_operand.vmem [shape: f32[32,16], index: 3, kind: input, shape index: {}]
  %s4 = inlined_call_operand.vmem [shape: f32[1,16], index: 4, kind: input, shape index: {}]
  %s5 = inlined_call_operand.hbm [shape: f32[2,16], index: 5, kind: output, shape index: {}]
  %s6 = sld [smem:[#allocation0]]
  $region30: #{tpu_custom_call.1} parent=0
    _
  %s8 = ssub.s32 1, %s6
  %s9 = scalar_select 0, %s8, %s6
  $region1: #{tpu_custom_call.1} parent=0
    #allocation2 [shape = 'u8[4096]{0}', space=vmem, size = 0x1000, scoped, tag = 'output window, operand 0, single buffered']
    #allocation3 [shape = 's32[1]{0}', space=sflag, size = 0x4, scoped, tag = 'scoped memory for tpu_custom_call.1']
    %10 = vsyncpa [#allocation3], 0
    // Predicated region
    $region2: #{tpu_custom_call.1} parent=1 // pred_check
      _
    $region3: #{tpu_custom_call.1} parent=1 // pred_check_branch
      %12 = sbr.rel (0) target = $region5
    $region4: #{tpu_custom_call.1} parent=1 // pred_region
      _
    $region5: #{tpu_custom_call.1} parent=1 // pred_fallthru
      _
    // Predicated region
    $region6: #{tpu_custom_call.1} parent=1 // pred_check
      _
    $region7: #{tpu_custom_call.1} parent=1 // pred_check_branch
      %14 = sbr.rel (0) target = $region9
    $region8: #{tpu_custom_call.1} parent=1 // pred_region
      _
    $region9: #{tpu_custom_call.1} parent=1 // pred_fallthru
      _
    // Predicated region
    $region10: #{tpu_custom_call.1} parent=1 // pred_check
      _
    $region11: #{tpu_custom_call.1} parent=1 // pred_check_branch
      %16 = sbr.rel (0) target = $region13
    $region12: #{tpu_custom_call.1} parent=1 // pred_region
      _
    $region13: #{tpu_custom_call.1} parent=1 // pred_fallthru
      _
    // Predicated region
    $region14: #{tpu_custom_call.1} parent=1 // pred_check
      _
    $region15: #{tpu_custom_call.1} parent=1 // pred_check_branch
      %18 = sbr.rel (0) target = $region17
    $region16: #{tpu_custom_call.1} parent=1 // pred_region
      _
    $region17: #{tpu_custom_call.1} parent=1 // pred_fallthru
      _
    // Predicated region
    $region18: #{tpu_custom_call.1} parent=1 // pred_check
      _
    $region19: #{tpu_custom_call.1} parent=1 // pred_check_branch
      %20 = sbr.rel (0) target = $region21
    $region20: #{tpu_custom_call.1} parent=1 // pred_region
      _
    $region21: #{tpu_custom_call.1} parent=1 // pred_fallthru
      _
    %v21 = vld [vmem:[%s0] sm:$0xf]
    %v22 = vld [vmem:[%s0 + $0x4] sm:$0xf]
    %v23 = vld [vmem:[%s0 + $0x8] sm:$0xf]
    %v24 = vld [vmem:[%s0 + $0xc] sm:$0xf]
    %v25 = vld [vmem:[%s1] sm:$0xff]
    %v26 = vld [vmem:[%s1 + $0x8] sm:$0xff]
    %v27 = vld [vmem:[%s1 + $0x10] sm:$0xff]
    %v28 = vld [vmem:[%s1 + $0x18] sm:$0xff]
    %v29 = vld [vmem:[%s1 + $0x20] sm:$0xff]
    %v30 = vld [vmem:[%s1 + $0x28] sm:$0xff]
    %v31 = vld [vmem:[%s1 + $0x30] sm:$0xff]
    %v32 = vld [vmem:[%s1 + $0x38] sm:$0xff]
    %v33 = vld [vmem:[%s1 + $0x40] sm:$0xff]
    %v34 = vld [vmem:[%s1 + $0x48] sm:$0xff]
    %v35 = vld [vmem:[%s1 + $0x50] sm:$0xff]
    %v36 = vld [vmem:[%s1 + $0x58] sm:$0xff]
    %v37 = vld [vmem:[%s1 + $0x60] sm:$0xff]
    %v38 = vld [vmem:[%s1 + $0x68] sm:$0xff]
    %v39 = vld [vmem:[%s1 + $0x70] sm:$0xff]
    %v40 = vld [vmem:[%s1 + $0x78] sm:$0xff]
    %v41 = vld [vmem:[%s1 + $0x80] sm:$0xff]
    %v42 = vld [vmem:[%s1 + $0x88] sm:$0xff]
    %v43 = vld [vmem:[%s1 + $0x90] sm:$0xff]
    %v44 = vld [vmem:[%s1 + $0x98] sm:$0xff]
    %v45 = vld [vmem:[%s2] sm:$0x1]
    %v47 = vlaneseq
    %v48 = vshrl.u32 %v47, 7
    %v49 = vsub.s32 0, %v48
    %v50 = vrot.slane %v45, %v49
    %v56 = vcombine.low %v21, %v22
    %v57 = vcombine.low %v23, %v24
    %v59 = vunpack.c.l.s4 1983009808
    %v60 = vunpack.c.0.s8 %v59
    %v61 = vlaneseq
    %v62 = vshrl.u32 %v61, 7
    %v63 = vsub.s32 %v60, %v62
    %v64 = vrot.slane %v56, %v63
    %v66 = vunpack.c.l.s4 1983009808
    %v67 = vunpack.c.0.s8 %v66
    %v68 = vlaneseq
    %v69 = vshrl.u32 %v68, 7
    %v70 = vsub.s32 %v67, %v69
    %v71 = vrot.slane %v57, %v70
    %v72 = vcombine.low %v64, %v71
    %v73 = vcombine.high %v64, %v71
    %vm75 = vcmask 261120
    %v76 = vsel %vm75, %v73, 0
    %78 = vmatprep.subr.mxu0 0.0
    %79 = vmatpush1.msra.mxu0 %v40
    %80 = vmatprep.subr.mxu0 0.0
    %81 = vmatpush1.msra.mxu0 %v39
    %82 = vmatprep.subr.mxu0 0.0
    %83 = vmatpush1.msra.mxu0 %v38
    %84 = vmatprep.subr.mxu0 0.0
    %85 = vmatpush1.msra.mxu0 %v37
    %86 = vmatprep.subr.mxu0 0.0
    %87 = vmatpush1.msra.mxu0 %v36
    %88 = vmatprep.subr.mxu0 0.0
    %89 = vmatpush1.msra.mxu0 %v35
    %90 = vmatprep.subr.mxu0 0.0
    %91 = vmatpush1.msra.mxu0 %v34
    %92 = vmatprep.subr.mxu0 0.0
    %93 = vmatpush1.msra.mxu0 %v33
    %94 = vmatprep.subr.mxu0 0.0
    %95 = vmatpush1.msra.mxu0 %v32
    %96 = vmatprep.subr.mxu0 0.0
    %97 = vmatpush1.msra.mxu0 %v31
    %98 = vmatprep.subr.mxu0 0.0
    %99 = vmatpush1.msra.mxu0 %v30
    %100 = vmatprep.subr.mxu0 0.0
    %101 = vmatpush1.msra.mxu0 %v29
    %102 = vmatprep.subr.mxu0 0.0
    %103 = vmatpush1.msra.mxu0 %v28
    %104 = vmatprep.subr.mxu0 0.0
    %105 = vmatpush1.msra.mxu0 %v27
    %106 = vmatprep.subr.mxu0 0.0
    %107 = vmatpush1.msra.mxu0 %v26
    %108 = vmatprep.subr.mxu0 0.0
    %109 = vmatpush1.msra.mxu0 %v25
    %110 = vmatprep.subr.mxu0 0.0
    %111 = vmatpush2.msra.mxu0 0.0
    %112 = vmatprep.subr.mxu0 0.0
    %113 = vmatpush2.msra.mxu0 0.0
    %114 = vmatprep.subr.mxu0 0.0
    %115 = vmatpush2.msra.mxu0 0.0
    %116 = vmatprep.subr.mxu0 0.0
    %117 = vmatpush2.msra.mxu0 0.0
    %118 = vmatprep.subr.mxu0 0.0
    %119 = vmatpush2.msra.mxu0 0.0
    %120 = vmatprep.subr.mxu0 0.0
    %121 = vmatpush2.msra.mxu0 0.0
    %122 = vmatprep.subr.mxu0 0.0
    %123 = vmatpush2.msra.mxu0 0.0
    %124 = vmatprep.subr.mxu0 0.0
    %125 = vmatpush2.msra.mxu0 0.0
    %126 = vmatprep.subr.mxu0 0.0
    %127 = vmatpush2.msra.mxu0 0.0
    %128 = vmatprep.subr.mxu0 0.0
    %129 = vmatpush2.msra.mxu0 0.0
    %130 = vmatprep.subr.mxu0 0.0
    %131 = vmatpush2.msra.mxu0 0.0
    %132 = vmatprep.subr.mxu0 0.0
    %133 = vmatpush2.msra.mxu0 0.0
    %134 = vmatprep.subr.mxu0 0.0
    %135 = vmatpush2.msra.mxu0 %v44
    %136 = vmatprep.subr.mxu0 0.0
    %137 = vmatpush2.msra.mxu0 %v43
    %138 = vmatprep.subr.mxu0 0.0
    %139 = vmatpush2.msra.mxu0 %v42
    %140 = vmatprep.subr.mxu0 0.0
    %141 = vmatpush2.msra.mxu0 %v41
    %142 = vmatprep.mubr.f32.mxu0 %v76
    %143 = vmatmul.mubr.f32.gmra.mxu0 %v72
    %v144 = vpop.f32.mrf.mxu0
    %v145 = vadd.f32 %v50, %v144
    %v146 = vpop.f32.mrf.mxu0
    %147 = vdwg.mxu0
    %v148 = vmax.f32 %v145, 0.0
    %v149 = vld [vmem:[%s3] sm:$0xff]
    %v150 = vld [vmem:[%s3 + $0x8] sm:$0xff]
    %v151 = vld [vmem:[%s3 + $0x10] sm:$0xff]
    %v152 = vld [vmem:[%s3 + $0x18] sm:$0xff]
    %v153 = vld [vmem:[%s4] sm:$0x1]
    %v155 = vlaneseq
    %v156 = vshrl.u32 %v155, 7
    %v157 = vsub.s32 0, %v156
    %v158 = vrot.slane %v153, %v157
    %v161 = vsel %vm75, %v148, 0
    %163 = vmatprep.subr.mxu0 0.0
    %164 = vmatpush1.msra.mxu0 0.0
    %165 = vmatprep.subr.mxu0 0.0
    %166 = vmatpush1.msra.mxu0 0.0
    %167 = vmatprep.subr.mxu0 0.0
    %168 = vmatpush1.msra.mxu0 0.0
    %169 = vmatprep.subr.mxu0 0.0
    %170 = vmatpush1.msra.mxu0 0.0
    %171 = vmatprep.subr.mxu0 0.0
    %172 = vmatpush1.msra.mxu0 0.0
    %173 = vmatprep.subr.mxu0 0.0
    %174 = vmatpush1.msra.mxu0 0.0
    %175 = vmatprep.subr.mxu0 0.0
    %176 = vmatpush1.msra.mxu0 0.0
    %177 = vmatprep.subr.mxu0 0.0
    %178 = vmatpush1.msra.mxu0 0.0
    %179 = vmatprep.subr.mxu0 0.0
    %180 = vmatpush1.msra.mxu0 0.0
    %181 = vmatprep.subr.mxu0 0.0
    %182 = vmatpush1.msra.mxu0 0.0
    %183 = vmatprep.subr.mxu0 0.0
    %184 = vmatpush1.msra.mxu0 0.0
    %185 = vmatprep.subr.mxu0 0.0
    %186 = vmatpush1.msra.mxu0 0.0
    %187 = vmatprep.subr.mxu0 0.0
    %188 = vmatpush1.msra.mxu0 %v152
    %189 = vmatprep.subr.mxu0 0.0
    %190 = vmatpush1.msra.mxu0 %v151
    %191 = vmatprep.subr.mxu0 0.0
    %192 = vmatpush1.msra.mxu0 %v150
    %193 = vmatprep.subr.mxu0 0.0
    %194 = vmatpush1.msra.mxu0 %v149
    %195 = vmatprep.subr.mxu0 0.0
    %196 = vmatpush2.msra.mxu0 0.0
    %197 = vmatprep.subr.mxu0 0.0
    %198 = vmatpush2.msra.mxu0 0.0
    %199 = vmatprep.subr.mxu0 0.0
    %200 = vmatpush2.msra.mxu0 0.0
    %201 = vmatprep.subr.mxu0 0.0
    %202 = vmatpush2.msra.mxu0 0.0
    %203 = vmatprep.subr.mxu0 0.0
    %204 = vmatpush2.msra.mxu0 0.0
    %205 = vmatprep.subr.mxu0 0.0
    %206 = vmatpush2.msra.mxu0 0.0
    %207 = vmatprep.subr.mxu0 0.0
    %208 = vmatpush2.msra.mxu0 0.0
    %209 = vmatprep.subr.mxu0 0.0
    %210 = vmatpush2.msra.mxu0 0.0
    %211 = vmatprep.subr.mxu0 0.0
    %212 = vmatpush2.msra.mxu0 0.0
    %213 = vmatprep.subr.mxu0 0.0
    %214 = vmatpush2.msra.mxu0 0.0
    %215 = vmatprep.subr.mxu0 0.0
    %216 = vmatpush2.msra.mxu0 0.0
    %217 = vmatprep.subr.mxu0 0.0
    %218 = vmatpush2.msra.mxu0 0.0
    %219 = vmatprep.subr.mxu0 0.0
    %220 = vmatpush2.msra.mxu0 0.0
    %221 = vmatprep.subr.mxu0 0.0
    %222 = vmatpush2.msra.mxu0 0.0
    %223 = vmatprep.subr.mxu0 0.0
    %224 = vmatpush2.msra.mxu0 0.0
    %225 = vmatprep.subr.mxu0 0.0
    %226 = vmatpush2.msra.mxu0 0.0
    %227 = vmatprep.mubr.f32.mxu0 0.0
    %228 = vmatmul.mubr.f32.gmra.mxu0 %v161
    %v229 = vpop.f32.mrf.mxu0
    %v230 = vadd.f32 %v158, %v229
    %v231 = vpop.f32.mrf.mxu0
    %232 = vdwg.mxu0
    %vm233 = vcmask 130048
    %234 = vst.msk [vmem:[#allocation2] sm:$0xff] %vm233, %v230
    // Predicated region
    $region22: #{tpu_custom_call.1} parent=1 // pred_check
      _
    $region23: #{tpu_custom_call.1} parent=1 // pred_check_branch
      %236 = sbr.rel (0) target = $region25
    $region24: #{tpu_custom_call.1} parent=1 // pred_region
      %s238 = ssub.s32 128, 32
      %239 = vsyncadd [#allocation3], %s238
      %s240 = sshll.u32 [#allocation2], 4
      %s241 = int_to_ptr.vmem [resolvable:$true] %s240
      %246 = dma.vmem_to_hbm [thread:$0]  %s241, 32, %s5, [#allocation3], 32, 32, 2
    $region25: #{tpu_custom_call.1} parent=1 // pred_fallthru
      _
    // Predicated region
    $region26: #{tpu_custom_call.1} parent=1 // pred_check
      _
    $region27: #{tpu_custom_call.1} parent=1 // pred_check_branch
      %248 = sbr.rel (0) target = $region29
    $region28: #{tpu_custom_call.1} parent=1 // pred_region
      %249 = dma.done [#allocation3], 128
    $region29: #{tpu_custom_call.1} parent=1 // pred_fallthru
      _
    %250 = vsyncpa [#allocation3], 1

</llo_original>
